<compile_context>
chip_gen: v5e
topology: v5e:2x2
jax: 0.10.0
libtpu: 0.0.40
codegen_flags: <defaults>
</compile_context>

<pallas_src>
import math
import functools

import jax
import jax.numpy as jnp
from jax.experimental import pallas as pl
from jax.experimental.pallas import tpu as pltpu


# ----------------------------------------------------------------------------
# Pallas kernels
# ----------------------------------------------------------------------------

def _group_broadcast(v, num_groups, cg, scale):
    """v: (C, 1) f32. Returns (C, 1) holding scale * (sum of v over each channel's group)."""
    rowid = jax.lax.broadcasted_iota(jnp.int32, v.shape, 0)
    out = jnp.zeros_like(v)
    for g in range(num_groups):           # static, small
        m = jnp.logical_and(rowid >= g * cg, rowid < (g + 1) * cg)
        s = jnp.sum(jnp.where(m, v, 0.0), keepdims=True)      # (1, 1)
        out = out + jnp.where(m, s * scale, 0.0)
    return out


def _gn_relu_conv_body(xp_ref, g_ref, bt_ref, w_ref, cb_ref, *, pad, L, num_groups):
    # xp: (C, L + 2*pad) f32 zero-padded activation, g/bt: (C, 1), w: (K, Cout, C) bf16,
    # cb: (Cout, 1) f32.  Returns (Cout, L) f32.
    xp = xp_ref[...]
    C = xp.shape[0]
    cg = C // num_groups
    x = xp[:, pad:pad + L] if pad else xp
    inv_n = 1.0 / float(cg * L)

    # GroupNorm statistics (two-pass, f32)
    rs = jnp.sum(x, axis=-1, keepdims=True)                    # (C, 1)
    mean = _group_broadcast(rs, num_groups, cg, inv_n)         # (C, 1)
    d = x - mean
    rv = jnp.sum(d * d, axis=-1, keepdims=True)
    var = _group_broadcast(rv, num_groups, cg, inv_n)
    inv_std = jax.lax.rsqrt(var + 1e-5)

    # normalize + affine + ReLU on the padded tile, then re-zero the pad columns so the
    # conv sees true zero padding (padding happens AFTER norm/activation).
    y = (xp - mean) * inv_std * g_ref[...] + bt_ref[...]
    y = jnp.maximum(y, 0.0)
    if pad:
        col = jax.lax.broadcasted_iota(jnp.int32, y.shape, 1)
        y = jnp.where(jnp.logical_and(col >= pad, col < pad + L), y, 0.0)
    yb = y.astype(jnp.bfloat16)

    # k-tap conv as K shifted matmuls, f32 accumulation
    K = w_ref.shape[0]
    out = cb_ref[...]                                          # (Cout, 1) bias, broadcasts
    for t in range(K):
        out = out + jnp.dot(w_ref[t], yb[:, t:t + L],
                            preferred_element_type=jnp.float32)
    return out


def _gn_relu_conv_kernel(xp_ref, g_ref, bt_ref, w_ref, cb_ref, o_ref, *,
                         pad, L, num_groups):
    o_ref[...] = _gn_relu_conv_body(xp_ref, g_ref, bt_ref, w_ref, cb_ref,
                                    pad=pad, L=L, num_groups=num_groups)


def _gn_relu_conv_res_kernel(xp_ref, g_ref, bt_ref, w_ref, cb_ref, res_ref, o_ref, *,
                             pad, L, num_groups):
    # residual add fused into the epilogue (ResnetBlock: h + to_out(x))
    o_ref[...] = _gn_relu_conv_body(xp_ref, g_ref, bt_ref, w_ref, cb_ref,
                                    pad=pad, L=L, num_groups=num_groups) + res_ref[...]


def _conv_taps_kernel(x_ref, w_ref, b_ref, o_ref):
    # x: (Cin, Lp) bf16 pre-padded, w: (K, Cout, Cin) bf16, b: (Cout, 1) f32
    K = w_ref.shape[0]
    Lout = o_ref.shape[-1]
    xp = x_ref[...]
    out = b_ref[...]
    for t in range(K):
        out = out + jnp.dot(w_ref[t], xp[:, t:t + Lout],
                            preferred_element_type=jnp.float32)
    o_ref[...] = out


def _strided_conv_kernel(xph_ref, w_ref, b_ref, o_ref, *, factor):
    # Polyphase strided conv (stride = factor).
    # xph: (factor, Cin, Lph) bf16 phase-decomposed padded input where
    #      xph[r, :, m] = x_pad[:, m*factor + r];  w: (K, Cout, Cin) bf16;  b: (Cout, 1) f32.
    # out[:, o] = b + sum_t w[t] @ x_pad[:, o*factor + t]  ==  sum_t w[t] @ xph[t%f][:, o + t//f]
    K = w_ref.shape[0]
    Lout = o_ref.shape[-1]
    out = b_ref[...]
    for t in range(K):
        r = t % factor
        e = t // factor
        out = out + jnp.dot(w_ref[t], xph_ref[r, :, e:e + Lout],
                            preferred_element_type=jnp.float32)
    o_ref[...] = out


def _mm_bias_kernel(w_ref, x_ref, b_ref, o_ref):
    # w: (Cout, Cin) bf16, x: (Cin, N) bf16, b: (Cout, 1) f32  ->  o: (Cout, N) f32
    o_ref[...] = (jnp.dot(w_ref[...], x_ref[...], preferred_element_type=jnp.float32)
                  + b_ref[...])


def _mm_bias_acc_kernel(a_ref, b_ref, bias_ref, o_ref, acc_ref):
    # tiled (M,N,K) matmul with f32 accumulator; bias added on the last K step
    @pl.when(pl.program_id(2) == 0)
    def _():
        acc_ref[...] = jnp.zeros_like(acc_ref)

    acc_ref[...] += jnp.dot(a_ref[...], b_ref[...], preferred_element_type=jnp.float32)

    @pl.when(pl.program_id(2) == pl.num_programs(2) - 1)
    def _():
        o_ref[...] = acc_ref[...] + bias_ref[...]


def _lstm_rec_kernel(gxi_ref, gxf_ref, gxg_ref, gxo_ref,
                     wi_ref, wf_ref, wg_ref, wo_ref,
                     o_ref, h_sc, c_sc):
    # gx*: (T, B, H) f32 pre-computed input gates; w*: (H, H) bf16 recurrent weights
    T = gxi_ref.shape[0]
    h_sc[...] = jnp.zeros_like(h_sc)
    c_sc[...] = jnp.zeros_like(c_sc)
    wi = wi_ref[...]
    wf = wf_ref[...]
    wg = wg_ref[...]
    wo = wo_ref[...]

    def step(t, carry):
        h = h_sc[...]
        c = c_sc[...]
        hb = h.astype(jnp.bfloat16)
        i = jax.nn.sigmoid(gxi_ref[t] + jnp.dot(hb, wi, preferred_element_type=jnp.float32))
        f = jax.nn.sigmoid(gxf_ref[t] + jnp.dot(hb, wf, preferred_element_type=jnp.float32))
        g = jnp.tanh(gxg_ref[t] + jnp.dot(hb, wg, preferred_element_type=jnp.float32))
        o = jax.nn.sigmoid(gxo_ref[t] + jnp.dot(hb, wo, preferred_element_type=jnp.float32))
        c_new = f * c + i * g
        h_new = o * jnp.tanh(c_new)
        h_sc[...] = h_new
        c_sc[...] = c_new
        o_ref[t] = h_new
        return carry

    jax.lax.fori_loop(0, T, step, 0, unroll=2)


def _lstm_out_kernel(yf_ref, yb_ref, w1_ref, w2_ref, b_ref, skip_ref, o_ref):
    # fused bidirectional projection + skip: y_f @ W1 + y_b @ W2 + b + skip
    o_ref[...] = (jnp.dot(yf_ref[...].astype(jnp.bfloat16), w1_ref[...],
                          preferred_element_type=jnp.float32)
                  + jnp.dot(yb_ref[...].astype(jnp.bfloat16), w2_ref[...],
                            preferred_element_type=jnp.float32)
                  + b_ref[...] + skip_ref[...])


# ----------------------------------------------------------------------------
# Layer wrappers (JAX glue around the Pallas kernels)
# ----------------------------------------------------------------------------

def fused_conv_block(x, p, num_groups, residual=None):
    """ConvBlock1d: GroupNorm -> ReLU -> Conv1d(k, stride=1, pad=(k-1)//2) [+ residual]."""
    B, C, L = x.shape
    w = p['conv']['w']                                  # (Cout, Cin, K)
    Cout, _, K = w.shape
    pad = (K - 1) // 2
    wk = jnp.transpose(w, (2, 0, 1)).astype(jnp.bfloat16)   # (K, Cout, Cin)
    xp = jnp.pad(x, ((0, 0), (0, 0), (pad, pad))) if pad else x
    Lp = xp.shape[-1]
    gamma = p['norm_gamma'].reshape(C, 1)
    beta = p['norm_beta'].reshape(C, 1)
    bias = p['conv']['b'].reshape(Cout, 1)

    in_specs = [
        pl.BlockSpec((None, C, Lp), lambda b: (b, 0, 0)),
        pl.BlockSpec((C, 1), lambda b: (0, 0)),
        pl.BlockSpec((C, 1), lambda b: (0, 0)),
        pl.BlockSpec((K, Cout, C), lambda b: (0, 0, 0)),
        pl.BlockSpec((Cout, 1), lambda b: (0, 0)),
    ]
    args = [xp, gamma, beta, wk, bias]
    if residual is None:
        kernel = functools.partial(_gn_relu_conv_kernel, pad=pad, L=L, num_groups=num_groups)
    else:
        kernel = functools.partial(_gn_relu_conv_res_kernel, pad=pad, L=L, num_groups=num_groups)
        in_specs.append(pl.BlockSpec((None, Cout, L), lambda b: (b, 0, 0)))
        args.append(residual)

    return pl.pallas_call(
        kernel,
        out_shape=jax.ShapeDtypeStruct((B, Cout, L), jnp.float32),
        grid=(B,),
        in_specs=in_specs,
        out_specs=pl.BlockSpec((None, Cout, L), lambda b: (b, 0, 0)),
        compiler_params=pltpu.CompilerParams(dimension_semantics=("parallel",)),
    )(*args)


def conv1d_taps(x, wk_bf16, bias, *, pad_left, pad_right, Lout):
    """Stride-1 'valid' conv via in-kernel tap accumulation on a zero-padded input."""
    B, Cin, L = x.shape
    K, Cout, _ = wk_bf16.shape
    xp = jnp.pad(x, ((0, 0), (0, 0), (pad_left, pad_right))).astype(jnp.bfloat16)
    Lp = xp.shape[-1]
    return pl.pallas_call(
        _conv_taps_kernel,
        out_shape=jax.ShapeDtypeStruct((B, Cout, Lout), jnp.float32),
        grid=(B,),
        in_specs=[
            pl.BlockSpec((None, Cin, Lp), lambda b: (b, 0, 0)),
            pl.BlockSpec((K, Cout, Cin), lambda b: (0, 0, 0)),
            pl.BlockSpec((Cout, 1), lambda b: (0, 0)),
        ],
        out_specs=pl.BlockSpec((None, Cout, Lout), lambda b: (b, 0, 0)),
        compiler_params=pltpu.CompilerParams(dimension_semantics=("parallel",)),
    )(xp, wk_bf16, bias.reshape(Cout, 1))


def conv1d_same(x, w, bias):
    """Conv1d with odd kernel, stride 1, 'same' padding."""
    Cout, Cin, K = w.shape
    pad = (K - 1) // 2
    L = x.shape[-1]
    wk = jnp.transpose(w, (2, 0, 1)).astype(jnp.bfloat16)
    return conv1d_taps(x, wk, bias, pad_left=pad, pad_right=pad, Lout=L)


def conv1x1(x, w, bias):
    """1x1 conv with the batch collapsed into the lane dimension (one lane-dense matmul)."""
    B, C, L = x.shape
    Cout = w.shape[0]
    x2 = jnp.transpose(x, (1, 0, 2)).reshape(C, B * L).astype(jnp.bfloat16)
    w2 = w.reshape(Cout, C).astype(jnp.bfloat16)
    out = pl.pallas_call(
        _mm_bias_kernel,
        out_shape=jax.ShapeDtypeStruct((Cout, B * L), jnp.float32),
    )(w2, x2, bias.reshape(Cout, 1))
    return jnp.transpose(out.reshape(Cout, B, L), (1, 0, 2))


def downsample_conv(x, w, bias, factor):
    """Downsample1d: Conv1d(kernel=2f+1, stride=f, padding=f).

    Polyphase strided conv: the f-padded input is split into `factor` phases (one cheap
    reshape/transpose in XLA), so every tap inside the kernel is a single dense
    (Cout,Cin)@(Cin,Lout) matmul and no MXU work is spent on outputs that the stride
    would discard (factor-fold FLOP saving vs. stride-1 conv + output slicing)."""
    Cout, Cin, K = w.shape
    B, _, L = x.shape
    f = factor
    Lout = -(-L // f)                       # ceil(L / f) == floor((L-1)/f) + 1
    Lph = Lout + (K - 1) // f               # phase length covering the max tap offset
    total = Lph * f
    # conv padding is f on the left; right padding is >= f (extra zeros only align phases
    # and are never multiplied into any output column < Lout).
    xp = jnp.pad(x, ((0, 0), (0, 0), (f, total - L - f)))
    xph = jnp.transpose(xp.reshape(B, Cin, Lph, f), (0, 3, 1, 2)).astype(jnp.bfloat16)
    wk = jnp.transpose(w, (2, 0, 1)).astype(jnp.bfloat16)    # (K, Cout, Cin)
    kernel = functools.partial(_strided_conv_kernel, factor=f)
    return pl.pallas_call(
        kernel,
        out_shape=jax.ShapeDtypeStruct((B, Cout, Lout), jnp.float32),
        grid=(B,),
        in_specs=[
            pl.BlockSpec((None, f, Cin, Lph), lambda b: (b, 0, 0, 0)),
            pl.BlockSpec((K, Cout, Cin), lambda b: (0, 0, 0)),
            pl.BlockSpec((Cout, 1), lambda b: (0, 0)),
        ],
        out_specs=pl.BlockSpec((None, Cout, Lout), lambda b: (b, 0, 0)),
        compiler_params=pltpu.CompilerParams(dimension_semantics=("parallel",)),
    )(xph, wk, bias.reshape(Cout, 1))


def upsample_conv_transpose(x, w, bias, factor):
    """Upsample1d: ConvTranspose1d(kernel=2f, stride=f, padding=f//2+f%2, output_padding=f%2),
    implemented as a polyphase bank of stride-1 tap convs (no zero stuffing)."""
    Cin, Cout, K = w.shape
    B, _, L = x.shape
    p = factor // 2 + factor % 2
    op = factor % 2
    Lout_total = (L - 1) * factor - 2 * p + K + op
    Lq = -(-Lout_total // factor)
    phase_outs = []
    for r in range(factor):
        taps = [(j, (r + p - j) // factor) for j in range(K) if (j - r - p) % factor == 0]
        taps.sort(key=lambda je: je[1])             # ascending offset e (contiguous integers)
        js = [j for j, _ in taps]
        e_min = taps[0][1]
        wk = jnp.stack([jnp.transpose(w[:, :, j]) for j in js], axis=0).astype(jnp.bfloat16)
        if e_min > 0:
            x_in = x[:, :, e_min:]
            pad_l = 0
        else:
            x_in = x
            pad_l = -e_min
        L_eff = x_in.shape[-1]
        T = len(js)
        pad_r = max(0, Lq + T - 1 - (L_eff + pad_l))
        phase_outs.append(conv1d_taps(x_in, wk, bias, pad_left=pad_l, pad_right=pad_r, Lout=Lq))
    out = jnp.stack(phase_outs, axis=-1).reshape(B, Cout, Lq * factor)
    return out[:, :, :Lout_total]


def resnet_block(x, p, num_groups):
    h = fused_conv_block(x, p['block1'], num_groups)
    if 'to_out' in p:
        res = conv1x1(x, p['to_out']['w'], p['to_out']['b'])
    else:
        res = x
    return fused_conv_block(h, p['block2'], num_groups, residual=res)


def _pick_tile(dim, pref):
    return pref if (dim >= pref and dim % pref == 0) else dim


def pallas_matmul_bias(a, b, bias, *, tm=128, tn=128, tk=256):
    """(M,K)@(K,N)+bias with a tiled (M,N,K) grid, bf16 operands, f32 accumulation."""
    M, K = a.shape
    N = b.shape[1]
    tm = _pick_tile(M, tm)
    tn = _pick_tile(N, tn)
    tk = _pick_tile(K, tk)
    return pl.pallas_call(
        _mm_bias_acc_kernel,
        out_shape=jax.ShapeDtypeStruct((M, N), jnp.float32),
        grid=(M // tm, N // tn, K // tk),
        in_specs=[
            pl.BlockSpec((tm, tk), lambda i, j, k: (i, k)),
            pl.BlockSpec((tk, tn), lambda i, j, k: (k, j)),
            pl.BlockSpec((1, tn), lambda i, j, k: (0, j)),
        ],
        out_specs=pl.BlockSpec((tm, tn), lambda i, j, k: (i, j)),
        scratch_shapes=[pltpu.VMEM((tm, tn), jnp.float32)],
        compiler_params=pltpu.CompilerParams(
            dimension_semantics=("parallel", "parallel", "arbitrary")),
    )(a.astype(jnp.bfloat16), b.astype(jnp.bfloat16), bias.reshape(1, N))


def pallas_lstm_direction(gx, w_hh):
    """gx: (T, B, 4H) precomputed input gates, w_hh: (4H, H) -> hidden states (T, B, H)."""
    T, B, G4 = gx.shape
    H = G4 // 4
    gx4 = gx.reshape(T, B, 4, H)
    gxs = [gx4[:, :, g, :] for g in range(4)]
    whs = [jnp.transpose(w_hh[g * H:(g + 1) * H, :]).astype(jnp.bfloat16) for g in range(4)]
    return pl.pallas_call(
        _lstm_rec_kernel,
        out_shape=jax.ShapeDtypeStruct((T, B, H), jnp.float32),
        scratch_shapes=[pltpu.VMEM((B, H), jnp.float32),
                        pltpu.VMEM((B, H), jnp.float32)],
    )(*gxs, *whs)


def lstm_layer(x, p):
    """Bidirectional single-layer LSTM with skip connection (encodec-style SLSTM). x: (B, C, T)."""
    B, C, T = x.shape
    H = C
    xt = jnp.transpose(x, (2, 0, 1))                  # (T, B, C)
    x2 = xt.reshape(T * B, C)

    # both directions' input gates in ONE tiled matmul
    w_ih_all = jnp.concatenate([p['w_ih_f'], p['w_ih_b']], axis=0)          # (8H, C)
    b_all = jnp.concatenate([p['b_ih_f'] + p['b_hh_f'],
                             p['b_ih_b'] + p['b_hh_b']], axis=0)            # (8H,)
    gx_all = pallas_matmul_bias(x2, jnp.transpose(w_ih_all), b_all).reshape(T, B, 8 * H)
    gx_f = gx_all[:, :, :4 * H]
    gx_b = gx_all[::-1, :, 4 * H:]                    # backward direction: reversed time

    y_f = pallas_lstm_direction(gx_f, p['w_hh_f'])
    y_b = pallas_lstm_direction(gx_b, p['w_hh_b'])[::-1]

    # fused: concat-free bidirectional projection + bias + skip
    w1 = jnp.transpose(p['w_lin'][:, :H]).astype(jnp.bfloat16)
    w2 = jnp.transpose(p['w_lin'][:, H:]).astype(jnp.bfloat16)
    y = pl.pallas_call(
        _lstm_out_kernel,
        out_shape=jax.ShapeDtypeStruct((T * B, H), jnp.float32),
    )(y_f.reshape(T * B, H), y_b.reshape(T * B, H), w1, w2,
      p['b_lin'].reshape(1, H), x2)
    return jnp.transpose(y.reshape(T, B, C), (1, 2, 0))   # (B, C, T)


# ----------------------------------------------------------------------------
# Parameter initialization (deterministic, PyTorch-like uniform bounds)
# ----------------------------------------------------------------------------

class Rng:
    def __init__(self, seed):
        self._key = jax.random.PRNGKey(seed)

    def next(self):
        self._key, sub = jax.random.split(self._key)
        return sub


def _uniform(rng, shape, bound):
    return jax.random.uniform(rng.next(), shape, jnp.float32, -bound, bound)


def init_conv(rng, cin, cout, k):
    bound = 1.0 / math.sqrt(cin * k)
    return {'w': _uniform(rng, (cout, cin, k), bound),
            'b': _uniform(rng, (cout,), bound)}


def init_conv_transpose(rng, cin, cout, k):
    bound = 1.0 / math.sqrt(cout * k)
    return {'w': _uniform(rng, (cin, cout, k), bound),
            'b': _uniform(rng, (cout,), bound)}


def init_conv_block(rng, cin, cout, k=3):
    return {'norm_gamma': jnp.ones((cin,), jnp.float32),
            'norm_beta': jnp.zeros((cin,), jnp.float32),
            'conv': init_conv(rng, cin, cout, k)}


def init_resnet(rng, cin, cout):
    p = {'block1': init_conv_block(rng, cin, cout),
         'block2': init_conv_block(rng, cout, cout)}
    if cin != cout:
        p['to_out'] = init_conv(rng, cin, cout, 1)
    return p


def init_lstm(rng, dim):
    b = 1.0 / math.sqrt(dim)
    bl = 1.0 / math.sqrt(2 * dim)
    return {
        'w_ih_f': _uniform(rng, (4 * dim, dim), b), 'w_hh_f': _uniform(rng, (4 * dim, dim), b),
        'b_ih_f': _uniform(rng, (4 * dim,), b), 'b_hh_f': _uniform(rng, (4 * dim,), b),
        'w_ih_b': _uniform(rng, (4 * dim, dim), b), 'w_hh_b': _uniform(rng, (4 * dim, dim), b),
        'b_ih_b': _uniform(rng, (4 * dim,), b), 'b_hh_b': _uniform(rng, (4 * dim,), b),
        'w_lin': _uniform(rng, (dim, 2 * dim), bl), 'b_lin': _uniform(rng, (dim,), bl),
    }


def init_encoder(rng, in_channels, out_channels, channels, factors, res_blocks):
    layers = []
    last = in_channels
    for i, ch in enumerate(channels):
        blocks = []
        for _ in range(res_blocks):
            blocks.append(init_resnet(rng, last, ch))
            last = ch
        down = init_conv(rng, ch, ch, 2 * factors[i] + 1)
        layers.append({'blocks': blocks, 'down': down, 'factor': factors[i]})
    return {'layers': layers,
            'lstm': init_lstm(rng, channels[-1]),
            'final_mean': init_conv(rng, channels[-1], out_channels, 1),
            'final_logsigma': init_conv(rng, channels[-1], out_channels, 1)}


def init_decoder(rng, in_channels, out_channels, channels, factors, res_blocks):
    layers = []
    initial = init_conv(rng, out_channels, channels[-1], 1)
    lstm = init_lstm(rng, channels[-1])
    for i in range(len(channels) - 1, -1, -1):
        f = factors[i]
        if f == 1:
            up = init_conv(rng, channels[i], channels[i], 3)
        else:
            up = init_conv_transpose(rng, channels[i], channels[i], 2 * f)
        blocks = []
        for j in range(res_blocks):
            oc = channels[i] if j != res_blocks - 1 else channels[max(i - 1, 0)]
            blocks.append(init_resnet(rng, channels[i], oc))
        layers.append({'up': up, 'blocks': blocks, 'factor': f})
    return {'initial_conv': initial, 'lstm': lstm, 'layers': layers,
            'final_conv': init_conv(rng, channels[0], in_channels, 1)}


# ----------------------------------------------------------------------------
# Forward passes
# ----------------------------------------------------------------------------

def encoder_forward(x, p, num_groups, noise_key):
    for layer in p['layers']:
        for bp in layer['blocks']:
            x = resnet_block(x, bp, num_groups)
        x = downsample_conv(x, layer['down']['w'], layer['down']['b'], layer['factor'])
    x = lstm_layer(x, p['lstm'])
    mean = conv1x1(x, p['final_mean']['w'], p['final_mean']['b'])
    log_std = conv1x1(x, p['final_logsigma']['w'], p['final_logsigma']['b'])
    std = jnp.exp(log_std) + 1e-5
    z = jax.random.normal(noise_key, mean.shape, jnp.float32) * std + mean
    return {'z': z, 'z_mean': mean, 'z_log_std': log_std}


def decoder_forward(z, p, num_groups):
    x = conv1x1(z, p['initial_conv']['w'], p['initial_conv']['b'])
    x = lstm_layer(x, p['lstm'])
    for layer in p['layers']:
        f = layer['factor']
        if f == 1:
            x = conv1d_same(x, layer['up']['w'], layer['up']['b'])
        else:
            x = upsample_conv_transpose(x, layer['up']['w'], layer['up']['b'], f)
        for bp in layer['blocks']:
            x = resnet_block(x, bp, num_groups)
    x = conv1x1(x, p['final_conv']['w'], p['final_conv']['b'])
    return {'x_hat': x}


def autoencoder_forward(x, params, num_groups, eff_padding, noise_key):
    # pre_process: right-pad length to a multiple of prod(factors), remember the length.
    x_length = x.shape[-1]
    pad = (-x_length) % eff_padding
    if pad:
        x = jnp.pad(x, ((0, 0), (0, 0), (0, pad)))
    enc = encoder_forward(x, params['encoder'], num_groups, noise_key)
    dec = decoder_forward(enc['z'], params['decoder'], num_groups)
    # post_process: crop back to original length.
    dec['x_hat'] = dec['x_hat'][..., :x_length]
    return {**enc, **dec}


# ----------------------------------------------------------------------------
# Main
# ----------------------------------------------------------------------------

if __name__ == "__main__":
    cfg = dict(in_channels=4, out_channels=4, channels=[8, 16], factors=[2, 2],
               res_blocks=2, num_groups=4)
    eff_padding = 1
    for f in cfg['factors']:
        eff_padding *= f

    rng = Rng(0)
    params = {
        'encoder': init_encoder(rng, cfg['in_channels'], cfg['out_channels'],
                                cfg['channels'], cfg['factors'], cfg['res_blocks']),
        'decoder': init_decoder(rng, cfg['in_channels'], cfg['out_channels'],
                                cfg['channels'], cfg['factors'], cfg['res_blocks']),
    }

    key = jax.random.PRNGKey(0)
    x = jax.random.normal(key, (2, cfg['in_channels'], 30), jnp.float32)  # (B, C, L)

    out = autoencoder_forward(x, params, cfg['num_groups'], eff_padding,
                              noise_key=jax.random.PRNGKey(42))
    out = jax.tree_util.tree_map(jax.block_until_ready, out)

    assert out['z'].shape == (2, cfg['out_channels'], 32 // eff_padding)
    assert out['z_mean'].shape == out['z'].shape
    assert out['z_log_std'].shape == out['z'].shape
    assert out['x_hat'].shape == x.shape
    assert all(bool(jnp.all(jnp.isfinite(v))) for v in out.values())

    print("KERNEL_OK")
</pallas_src>

<mosaic_0001>
module attributes {stable_mosaic.version = 11 : i64} {
  func.func @_gn_relu_conv_kernel(%arg0: i32, %arg1: memref<1x4x34xf32, #tpu.memory_space<vmem>>, %arg2: memref<4x1xf32, #tpu.memory_space<vmem>>, %arg3: memref<4x1xf32, #tpu.memory_space<vmem>>, %arg4: memref<3x8x4xbf16, #tpu.memory_space<vmem>>, %arg5: memref<8x1xf32, #tpu.memory_space<vmem>>, %arg6: memref<1x8x32xf32, #tpu.memory_space<vmem>>) attributes {dimension_semantics = [#tpu.dimension_semantics<parallel>], iteration_bounds = array<i64: 2>, scalar_prefetch = 0 : i64, scratch_operands = 0 : i64, tpu.core_type = #tpu.core_type<tc>, window_params = [{transform_indices = @transform_0, window_bounds = array<i64: 1, 4, 34>}, {pipeline_mode = #tpu.pipeline_mode<synchronous>, transform_indices = @transform_1, window_bounds = array<i64: 4, 1>}, {pipeline_mode = #tpu.pipeline_mode<synchronous>, transform_indices = @transform_2, window_bounds = array<i64: 4, 1>}, {pipeline_mode = #tpu.pipeline_mode<synchronous>, transform_indices = @transform_3, window_bounds = array<i64: 3, 8, 4>}, {pipeline_mode = #tpu.pipeline_mode<synchronous>, transform_indices = @transform_4, window_bounds = array<i64: 8, 1>}, {transform_indices = @transform_5, window_bounds = array<i64: 1, 8, 32>}]} {
    %c0 = arith.constant 0 : index
    %c0_0 = arith.constant 0 : index
    %c0_1 = arith.constant 0 : index
    %0 = vector.load %arg1[%c0, %c0_0, %c0_1] : memref<1x4x34xf32, #tpu.memory_space<vmem>>, vector<1x4x34xf32>
    %1 = vector.shape_cast %0 : vector<1x4x34xf32> to vector<4x34xf32>
    %2 = vector.extract_strided_slice %1 {offsets = [0, 1], sizes = [4, 32], strides = [1, 1]} : vector<4x34xf32> to vector<4x32xf32>
    %cst = arith.constant dense<0.000000e+00> : vector<4xf32>
    %3 = vector.multi_reduction <add>, %2, %cst [1] : vector<4x32xf32> to vector<4xf32>
    %4 = vector.shape_cast %3 : vector<4xf32> to vector<4x1xf32>
    %5 = tpu.iota {dimensions = array<i32: 0>} : vector<4x1xi32>
    %cst_2 = arith.constant 0.000000e+00 : f32
    %6 = vector.broadcast %cst_2 : f32 to vector<4x1xf32>
    %c0_i32 = arith.constant 0 : i32
    %7 = vector.broadcast %c0_i32 : i32 to vector<4x1xi32>
    %8 = arith.cmpi sge, %5, %7 : vector<4x1xi32>
    %c1_i32 = arith.constant 1 : i32
    %9 = vector.broadcast %c1_i32 : i32 to vector<4x1xi32>
    %10 = arith.cmpi slt, %5, %9 : vector<4x1xi32>
    %11 = arith.andi %8, %10 : vector<4x1xi1>
    %cst_3 = arith.constant 0.000000e+00 : f32
    %12 = vector.broadcast %cst_3 : f32 to vector<4x1xf32>
    %13 = arith.select %11, %4, %12 : vector<4x1xi1>, vector<4x1xf32>
    %14 = vector.shape_cast %13 : vector<4x1xf32> to vector<1x4x1xf32>
    %cst_4 = arith.constant dense<0.000000e+00> : vector<1xf32>
    %15 = vector.multi_reduction <add>, %14, %cst_4 [1, 2] : vector<1x4x1xf32> to vector<1xf32>
    %16 = vector.shape_cast %15 : vector<1xf32> to vector<1x1x1xf32>
    %17 = vector.extract %16[0, 0, 0] : f32 from vector<1x1x1xf32>
    %18 = vector.broadcast %17 : f32 to vector<1x1xf32>
    %cst_5 = arith.constant 3.125000e-02 : f32
    %19 = vector.broadcast %cst_5 : f32 to vector<1x1xf32>
    %20 = arith.mulf %18, %19 : vector<1x1xf32>
    %cst_6 = arith.constant 0.000000e+00 : f32
    %21 = vector.shape_cast %20 : vector<1x1xf32> to vector<1x1xf32>
    %22 = vector.broadcast %21 : vector<1x1xf32> to vector<4x1xf32>
    %23 = vector.broadcast %cst_6 : f32 to vector<4x1xf32>
    %24 = arith.select %11, %22, %23 : vector<4x1xi1>, vector<4x1xf32>
    %25 = arith.addf %6, %24 : vector<4x1xf32>
    %c1_i32_7 = arith.constant 1 : i32
    %26 = vector.broadcast %c1_i32_7 : i32 to vector<4x1xi32>
    %27 = arith.cmpi sge, %5, %26 : vector<4x1xi32>
    %c2_i32 = arith.constant 2 : i32
    %28 = vector.broadcast %c2_i32 : i32 to vector<4x1xi32>
    %29 = arith.cmpi slt, %5, %28 : vector<4x1xi32>
    %30 = arith.andi %27, %29 : vector<4x1xi1>
    %cst_8 = arith.constant 0.000000e+00 : f32
    %31 = vector.broadcast %cst_8 : f32 to vector<4x1xf32>
    %32 = arith.select %30, %4, %31 : vector<4x1xi1>, vector<4x1xf32>
    %33 = vector.shape_cast %32 : vector<4x1xf32> to vector<1x4x1xf32>
    %cst_9 = arith.constant dense<0.000000e+00> : vector<1xf32>
    %34 = vector.multi_reduction <add>, %33, %cst_9 [1, 2] : vector<1x4x1xf32> to vector<1xf32>
    %35 = vector.shape_cast %34 : vector<1xf32> to vector<1x1x1xf32>
    %36 = vector.extract %35[0, 0, 0] : f32 from vector<1x1x1xf32>
    %37 = vector.broadcast %36 : f32 to vector<1x1xf32>
    %cst_10 = arith.constant 3.125000e-02 : f32
    %38 = vector.broadcast %cst_10 : f32 to vector<1x1xf32>
    %39 = arith.mulf %37, %38 : vector<1x1xf32>
    %cst_11 = arith.constant 0.000000e+00 : f32
    %40 = vector.shape_cast %39 : vector<1x1xf32> to vector<1x1xf32>
    %41 = vector.broadcast %40 : vector<1x1xf32> to vector<4x1xf32>
    %42 = vector.broadcast %cst_11 : f32 to vector<4x1xf32>
    %43 = arith.select %30, %41, %42 : vector<4x1xi1>, vector<4x1xf32>
    %44 = arith.addf %25, %43 : vector<4x1xf32>
    %c2_i32_12 = arith.constant 2 : i32
    %45 = vector.broadcast %c2_i32_12 : i32 to vector<4x1xi32>
    %46 = arith.cmpi sge, %5, %45 : vector<4x1xi32>
    %c3_i32 = arith.constant 3 : i32
    %47 = vector.broadcast %c3_i32 : i32 to vector<4x1xi32>
    %48 = arith.cmpi slt, %5, %47 : vector<4x1xi32>
    %49 = arith.andi %46, %48 : vector<4x1xi1>
    %cst_13 = arith.constant 0.000000e+00 : f32
    %50 = vector.broadcast %cst_13 : f32 to vector<4x1xf32>
    %51 = arith.select %49, %4, %50 : vector<4x1xi1>, vector<4x1xf32>
    %52 = vector.shape_cast %51 : vector<4x1xf32> to vector<1x4x1xf32>
    %cst_14 = arith.constant dense<0.000000e+00> : vector<1xf32>
    %53 = vector.multi_reduction <add>, %52, %cst_14 [1, 2] : vector<1x4x1xf32> to vector<1xf32>
    %54 = vector.shape_cast %53 : vector<1xf32> to vector<1x1x1xf32>
    %55 = vector.extract %54[0, 0, 0] : f32 from vector<1x1x1xf32>
    %56 = vector.broadcast %55 : f32 to vector<1x1xf32>
    %cst_15 = arith.constant 3.125000e-02 : f32
    %57 = vector.broadcast %cst_15 : f32 to vector<1x1xf32>
    %58 = arith.mulf %56, %57 : vector<1x1xf32>
    %cst_16 = arith.constant 0.000000e+00 : f32
    %59 = vector.shape_cast %58 : vector<1x1xf32> to vector<1x1xf32>
    %60 = vector.broadcast %59 : vector<1x1xf32> to vector<4x1xf32>
    %61 = vector.broadcast %cst_16 : f32 to vector<4x1xf32>
    %62 = arith.select %49, %60, %61 : vector<4x1xi1>, vector<4x1xf32>
    %63 = arith.addf %44, %62 : vector<4x1xf32>
    %c3_i32_17 = arith.constant 3 : i32
    %64 = vector.broadcast %c3_i32_17 : i32 to vector<4x1xi32>
    %65 = arith.cmpi sge, %5, %64 : vector<4x1xi32>
    %c4_i32 = arith.constant 4 : i32
    %66 = vector.broadcast %c4_i32 : i32 to vector<4x1xi32>
    %67 = arith.cmpi slt, %5, %66 : vector<4x1xi32>
    %68 = arith.andi %65, %67 : vector<4x1xi1>
    %cst_18 = arith.constant 0.000000e+00 : f32
    %69 = vector.broadcast %cst_18 : f32 to vector<4x1xf32>
    %70 = arith.select %68, %4, %69 : vector<4x1xi1>, vector<4x1xf32>
    %71 = vector.shape_cast %70 : vector<4x1xf32> to vector<1x4x1xf32>
    %cst_19 = arith.constant dense<0.000000e+00> : vector<1xf32>
    %72 = vector.multi_reduction <add>, %71, %cst_19 [1, 2] : vector<1x4x1xf32> to vector<1xf32>
    %73 = vector.shape_cast %72 : vector<1xf32> to vector<1x1x1xf32>
    %74 = vector.extract %73[0, 0, 0] : f32 from vector<1x1x1xf32>
    %75 = vector.broadcast %74 : f32 to vector<1x1xf32>
    %cst_20 = arith.constant 3.125000e-02 : f32
    %76 = vector.broadcast %cst_20 : f32 to vector<1x1xf32>
    %77 = arith.mulf %75, %76 : vector<1x1xf32>
    %cst_21 = arith.constant 0.000000e+00 : f32
    %78 = vector.shape_cast %77 : vector<1x1xf32> to vector<1x1xf32>
    %79 = vector.broadcast %78 : vector<1x1xf32> to vector<4x1xf32>
    %80 = vector.broadcast %cst_21 : f32 to vector<4x1xf32>
    %81 = arith.select %68, %79, %80 : vector<4x1xi1>, vector<4x1xf32>
    %82 = arith.addf %63, %81 : vector<4x1xf32>
    %83 = vector.broadcast %82 : vector<4x1xf32> to vector<4x32xf32>
    %84 = arith.subf %2, %83 : vector<4x32xf32>
    %85 = arith.mulf %84, %84 : vector<4x32xf32>
    %cst_22 = arith.constant dense<0.000000e+00> : vector<4xf32>
    %86 = vector.multi_reduction <add>, %85, %cst_22 [1] : vector<4x32xf32> to vector<4xf32>
    %87 = vector.shape_cast %86 : vector<4xf32> to vector<4x1xf32>
    %88 = tpu.iota {dimensions = array<i32: 0>} : vector<4x1xi32>
    %cst_23 = arith.constant 0.000000e+00 : f32
    %89 = vector.broadcast %cst_23 : f32 to vector<4x1xf32>
    %c0_i32_24 = arith.constant 0 : i32
    %90 = vector.broadcast %c0_i32_24 : i32 to vector<4x1xi32>
    %91 = arith.cmpi sge, %88, %90 : vector<4x1xi32>
    %c1_i32_25 = arith.constant 1 : i32
    %92 = vector.broadcast %c1_i32_25 : i32 to vector<4x1xi32>
    %93 = arith.cmpi slt, %88, %92 : vector<4x1xi32>
    %94 = arith.andi %91, %93 : vector<4x1xi1>
    %cst_26 = arith.constant 0.000000e+00 : f32
    %95 = vector.broadcast %cst_26 : f32 to vector<4x1xf32>
    %96 = arith.select %94, %87, %95 : vector<4x1xi1>, vector<4x1xf32>
    %97 = vector.shape_cast %96 : vector<4x1xf32> to vector<1x4x1xf32>
    %cst_27 = arith.constant dense<0.000000e+00> : vector<1xf32>
    %98 = vector.multi_reduction <add>, %97, %cst_27 [1, 2] : vector<1x4x1xf32> to vector<1xf32>
    %99 = vector.shape_cast %98 : vector<1xf32> to vector<1x1x1xf32>
    %100 = vector.extract %99[0, 0, 0] : f32 from vector<1x1x1xf32>
    %101 = vector.broadcast %100 : f32 to vector<1x1xf32>
    %cst_28 = arith.constant 3.125000e-02 : f32
    %102 = vector.broadcast %cst_28 : f32 to vector<1x1xf32>
    %103 = arith.mulf %101, %102 : vector<1x1xf32>
    %cst_29 = arith.constant 0.000000e+00 : f32
    %104 = vector.shape_cast %103 : vector<1x1xf32> to vector<1x1xf32>
    %105 = vector.broadcast %104 : vector<1x1xf32> to vector<4x1xf32>
    %106 = vector.broadcast %cst_29 : f32 to vector<4x1xf32>
    %107 = arith.select %94, %105, %106 : vector<4x1xi1>, vector<4x1xf32>
    %108 = arith.addf %89, %107 : vector<4x1xf32>
    %c1_i32_30 = arith.constant 1 : i32
    %109 = vector.broadcast %c1_i32_30 : i32 to vector<4x1xi32>
    %110 = arith.cmpi sge, %88, %109 : vector<4x1xi32>
    %c2_i32_31 = arith.constant 2 : i32
    %111 = vector.broadcast %c2_i32_31 : i32 to vector<4x1xi32>
    %112 = arith.cmpi slt, %88, %111 : vector<4x1xi32>
    %113 = arith.andi %110, %112 : vector<4x1xi1>
    %cst_32 = arith.constant 0.000000e+00 : f32
    %114 = vector.broadcast %cst_32 : f32 to vector<4x1xf32>
    %115 = arith.select %113, %87, %114 : vector<4x1xi1>, vector<4x1xf32>
    %116 = vector.shape_cast %115 : vector<4x1xf32> to vector<1x4x1xf32>
    %cst_33 = arith.constant dense<0.000000e+00> : vector<1xf32>
    %117 = vector.multi_reduction <add>, %116, %cst_33 [1, 2] : vector<1x4x1xf32> to vector<1xf32>
    %118 = vector.shape_cast %117 : vector<1xf32> to vector<1x1x1xf32>
    %119 = vector.extract %118[0, 0, 0] : f32 from vector<1x1x1xf32>
    %120 = vector.broadcast %119 : f32 to vector<1x1xf32>
    %cst_34 = arith.constant 3.125000e-02 : f32
    %121 = vector.broadcast %cst_34 : f32 to vector<1x1xf32>
    %122 = arith.mulf %120, %121 : vector<1x1xf32>
    %cst_35 = arith.constant 0.000000e+00 : f32
    %123 = vector.shape_cast %122 : vector<1x1xf32> to vector<1x1xf32>
    %124 = vector.broadcast %123 : vector<1x1xf32> to vector<4x1xf32>
    %125 = vector.broadcast %cst_35 : f32 to vector<4x1xf32>
    %126 = arith.select %113, %124, %125 : vector<4x1xi1>, vector<4x1xf32>
    %127 = arith.addf %108, %126 : vector<4x1xf32>
    %c2_i32_36 = arith.constant 2 : i32
    %128 = vector.broadcast %c2_i32_36 : i32 to vector<4x1xi32>
    %129 = arith.cmpi sge, %88, %128 : vector<4x1xi32>
    %c3_i32_37 = arith.constant 3 : i32
    %130 = vector.broadcast %c3_i32_37 : i32 to vector<4x1xi32>
    %131 = arith.cmpi slt, %88, %130 : vector<4x1xi32>
    %132 = arith.andi %129, %131 : vector<4x1xi1>
    %cst_38 = arith.constant 0.000000e+00 : f32
    %133 = vector.broadcast %cst_38 : f32 to vector<4x1xf32>
    %134 = arith.select %132, %87, %133 : vector<4x1xi1>, vector<4x1xf32>
    %135 = vector.shape_cast %134 : vector<4x1xf32> to vector<1x4x1xf32>
    %cst_39 = arith.constant dense<0.000000e+00> : vector<1xf32>
    %136 = vector.multi_reduction <add>, %135, %cst_39 [1, 2] : vector<1x4x1xf32> to vector<1xf32>
    %137 = vector.shape_cast %136 : vector<1xf32> to vector<1x1x1xf32>
    %138 = vector.extract %137[0, 0, 0] : f32 from vector<1x1x1xf32>
    %139 = vector.broadcast %138 : f32 to vector<1x1xf32>
    %cst_40 = arith.constant 3.125000e-02 : f32
    %140 = vector.broadcast %cst_40 : f32 to vector<1x1xf32>
    %141 = arith.mulf %139, %140 : vector<1x1xf32>
    %cst_41 = arith.constant 0.000000e+00 : f32
    %142 = vector.shape_cast %141 : vector<1x1xf32> to vector<1x1xf32>
    %143 = vector.broadcast %142 : vector<1x1xf32> to vector<4x1xf32>
    %144 = vector.broadcast %cst_41 : f32 to vector<4x1xf32>
    %145 = arith.select %132, %143, %144 : vector<4x1xi1>, vector<4x1xf32>
    %146 = arith.addf %127, %145 : vector<4x1xf32>
    %c3_i32_42 = arith.constant 3 : i32
    %147 = vector.broadcast %c3_i32_42 : i32 to vector<4x1xi32>
    %148 = arith.cmpi sge, %88, %147 : vector<4x1xi32>
    %c4_i32_43 = arith.constant 4 : i32
    %149 = vector.broadcast %c4_i32_43 : i32 to vector<4x1xi32>
    %150 = arith.cmpi slt, %88, %149 : vector<4x1xi32>
    %151 = arith.andi %148, %150 : vector<4x1xi1>
    %cst_44 = arith.constant 0.000000e+00 : f32
    %152 = vector.broadcast %cst_44 : f32 to vector<4x1xf32>
    %153 = arith.select %151, %87, %152 : vector<4x1xi1>, vector<4x1xf32>
    %154 = vector.shape_cast %153 : vector<4x1xf32> to vector<1x4x1xf32>
    %cst_45 = arith.constant dense<0.000000e+00> : vector<1xf32>
    %155 = vector.multi_reduction <add>, %154, %cst_45 [1, 2] : vector<1x4x1xf32> to vector<1xf32>
    %156 = vector.shape_cast %155 : vector<1xf32> to vector<1x1x1xf32>
    %157 = vector.extract %156[0, 0, 0] : f32 from vector<1x1x1xf32>
    %158 = vector.broadcast %157 : f32 to vector<1x1xf32>
    %cst_46 = arith.constant 3.125000e-02 : f32
    %159 = vector.broadcast %cst_46 : f32 to vector<1x1xf32>
    %160 = arith.mulf %158, %159 : vector<1x1xf32>
    %cst_47 = arith.constant 0.000000e+00 : f32
    %161 = vector.shape_cast %160 : vector<1x1xf32> to vector<1x1xf32>
    %162 = vector.broadcast %161 : vector<1x1xf32> to vector<4x1xf32>
    %163 = vector.broadcast %cst_47 : f32 to vector<4x1xf32>
    %164 = arith.select %151, %162, %163 : vector<4x1xi1>, vector<4x1xf32>
    %165 = arith.addf %146, %164 : vector<4x1xf32>
    %cst_48 = arith.constant 9.99999974E-6 : f32
    %166 = vector.broadcast %cst_48 : f32 to vector<4x1xf32>
    %167 = arith.addf %165, %166 : vector<4x1xf32>
    %168 = math.rsqrt %167 : vector<4x1xf32>
    %169 = vector.broadcast %82 : vector<4x1xf32> to vector<4x34xf32>
    %170 = arith.subf %1, %169 : vector<4x34xf32>
    %171 = vector.broadcast %168 : vector<4x1xf32> to vector<4x34xf32>
    %172 = arith.mulf %170, %171 : vector<4x34xf32>
    %c0_49 = arith.constant 0 : index
    %c0_50 = arith.constant 0 : index
    %173 = vector.load %arg2[%c0_49, %c0_50] : memref<4x1xf32, #tpu.memory_space<vmem>>, vector<4x1xf32>
    %174 = vector.broadcast %173 : vector<4x1xf32> to vector<4x34xf32>
    %175 = arith.mulf %172, %174 : vector<4x34xf32>
    %c0_51 = arith.constant 0 : index
    %c0_52 = arith.constant 0 : index
    %176 = vector.load %arg3[%c0_51, %c0_52] : memref<4x1xf32, #tpu.memory_space<vmem>>, vector<4x1xf32>
    %177 = vector.broadcast %176 : vector<4x1xf32> to vector<4x34xf32>
    %178 = arith.addf %175, %177 : vector<4x34xf32>
    %cst_53 = arith.constant 0.000000e+00 : f32
    %179 = vector.broadcast %cst_53 : f32 to vector<4x34xf32>
    %180 = arith.maximumf %178, %179 : vector<4x34xf32>
    %181 = tpu.iota {dimensions = array<i32: 1>} : vector<4x34xi32>
    %c1_i32_54 = arith.constant 1 : i32
    %182 = vector.broadcast %c1_i32_54 : i32 to vector<4x34xi32>
    %183 = arith.cmpi sge, %181, %182 : vector<4x34xi32>
    %c33_i32 = arith.constant 33 : i32
    %184 = vector.broadcast %c33_i32 : i32 to vector<4x34xi32>
    %185 = arith.cmpi slt, %181, %184 : vector<4x34xi32>
    %186 = arith.andi %183, %185 : vector<4x34xi1>
    %cst_55 = arith.constant 0.000000e+00 : f32
    %187 = vector.broadcast %cst_55 : f32 to vector<4x34xf32>
    %188 = arith.select %186, %180, %187 : vector<4x34xi1>, vector<4x34xf32>
    %189 = arith.truncf %188 : vector<4x34xf32> to vector<4x34xbf16>
    %c0_56 = arith.constant 0 : index
    %c0_57 = arith.constant 0 : index
    %190 = vector.load %arg5[%c0_56, %c0_57] : memref<8x1xf32, #tpu.memory_space<vmem>>, vector<8x1xf32>
    %c0_58 = arith.constant 0 : index
    %c0_59 = arith.constant 0 : index
    %c0_60 = arith.constant 0 : index
    %191 = vector.load %arg4[%c0_58, %c0_59, %c0_60] : memref<3x8x4xbf16, #tpu.memory_space<vmem>>, vector<1x8x4xbf16>
    %192 = vector.shape_cast %191 : vector<1x8x4xbf16> to vector<8x4xbf16>
    %193 = vector.extract_strided_slice %189 {offsets = [0, 0], sizes = [4, 32], strides = [1, 1]} : vector<4x34xbf16> to vector<4x32xbf16>
    %cst_61 = arith.constant dense<0.000000e+00> : vector<8x32xf32>
    %194 = tpu.matmul %192, %193, %cst_61 {dimension_numbers = #tpu.dot_dimension_numbers<[1], [0], [0], [1], [0, 0, 1, 1], [], []>} : vector<8x4xbf16>, vector<4x32xbf16>, vector<8x32xf32> -> vector<8x32xf32>
    %195 = vector.broadcast %190 : vector<8x1xf32> to vector<8x32xf32>
    %196 = arith.addf %195, %194 : vector<8x32xf32>
    %c1 = arith.constant 1 : index
    %c0_62 = arith.constant 0 : index
    %c0_63 = arith.constant 0 : index
    %197 = vector.load %arg4[%c1, %c0_62, %c0_63] : memref<3x8x4xbf16, #tpu.memory_space<vmem>>, vector<1x8x4xbf16>
    %198 = vector.shape_cast %197 : vector<1x8x4xbf16> to vector<8x4xbf16>
    %199 = vector.extract_strided_slice %189 {offsets = [0, 1], sizes = [4, 32], strides = [1, 1]} : vector<4x34xbf16> to vector<4x32xbf16>
    %cst_64 = arith.constant dense<0.000000e+00> : vector<8x32xf32>
    %200 = tpu.matmul %198, %199, %cst_64 {dimension_numbers = #tpu.dot_dimension_numbers<[1], [0], [0], [1], [0, 0, 1, 1], [], []>} : vector<8x4xbf16>, vector<4x32xbf16>, vector<8x32xf32> -> vector<8x32xf32>
    %201 = arith.addf %196, %200 : vector<8x32xf32>
    %c2 = arith.constant 2 : index
    %c0_65 = arith.constant 0 : index
    %c0_66 = arith.constant 0 : index
    %202 = vector.load %arg4[%c2, %c0_65, %c0_66] : memref<3x8x4xbf16, #tpu.memory_space<vmem>>, vector<1x8x4xbf16>
    %203 = vector.shape_cast %202 : vector<1x8x4xbf16> to vector<8x4xbf16>
    %204 = vector.extract_strided_slice %189 {offsets = [0, 2], sizes = [4, 32], strides = [1, 1]} : vector<4x34xbf16> to vector<4x32xbf16>
    %cst_67 = arith.constant dense<0.000000e+00> : vector<8x32xf32>
    %205 = tpu.matmul %203, %204, %cst_67 {dimension_numbers = #tpu.dot_dimension_numbers<[1], [0], [0], [1], [0, 0, 1, 1], [], []>} : vector<8x4xbf16>, vector<4x32xbf16>, vector<8x32xf32> -> vector<8x32xf32>
    %206 = arith.addf %201, %205 : vector<8x32xf32>
    %c0_68 = arith.constant 0 : index
    %c0_69 = arith.constant 0 : index
    %c0_70 = arith.constant 0 : index
    %207 = vector.load %arg6[%c0_68, %c0_69, %c0_70] : memref<1x8x32xf32, #tpu.memory_space<vmem>>, vector<1x8x32xf32>
    %208 = vector.shape_cast %207 : vector<1x8x32xf32> to vector<8x32xf32>
    %209 = vector.shape_cast %206 : vector<8x32xf32> to vector<1x8x32xf32>
    tpu.vector_store %arg6[%c0_68, %c0_69, %c0_70], %209 {strides = array<i32>} : memref<1x8x32xf32, #tpu.memory_space<vmem>>, vector<1x8x32xf32>,
    return
  }
  func.func @transform_0(%arg0: i32) -> (i32, i32, i32) {
    %c0_i32 = arith.constant 0 : i32
    %c0_i32_0 = arith.constant 0 : i32
    %c0_i32_1 = arith.constant 0 : i32
    return %arg0, %c0_i32, %c0_i32_0 : i32, i32, i32
  }
  func.func @transform_1(%arg0: i32) -> (i32, i32) {
    %c0_i32 = arith.constant 0 : i32
    %c0_i32_0 = arith.constant 0 : i32
    %c0_i32_1 = arith.constant 0 : i32
    return %c0_i32, %c0_i32_0 : i32, i32
  }
  func.func @transform_2(%arg0: i32) -> (i32, i32) {
    %c0_i32 = arith.constant 0 : i32
    %c0_i32_0 = arith.constant 0 : i32
    %c0_i32_1 = arith.constant 0 : i32
    return %c0_i32, %c0_i32_0 : i32, i32
  }
  func.func @transform_3(%arg0: i32) -> (i32, i32, i32) {
    %c0_i32 = arith.constant 0 : i32
    %c0_i32_0 = arith.constant 0 : i32
    %c0_i32_1 = arith.constant 0 : i32
    %c0_i32_2 = arith.constant 0 : i32
    return %c0_i32, %c0_i32_0, %c0_i32_1 : i32, i32, i32
  }
  func.func @transform_4(%arg0: i32) -> (i32, i32) {
    %c0_i32 = arith.constant 0 : i32
    %c0_i32_0 = arith.constant 0 : i32
    %c0_i32_1 = arith.constant 0 : i32
    return %c0_i32, %c0_i32_0 : i32, i32
  }
  func.func @transform_5(%arg0: i32) -> (i32, i32, i32) {
    %c0_i32 = arith.constant 0 : i32
    %c0_i32_0 = arith.constant 0 : i32
    %c0_i32_1 = arith.constant 0 : i32
    return %arg0, %c0_i32, %c0_i32_0 : i32, i32, i32
  }
}

</mosaic_0001>

<llo_original>
// kernel: tpu_custom_call.1
$region0: #{tpu_custom_call.1}
  #allocation0 [shape = 'u32[]', space=smem, size = 0x4, offset = 0x4, fixed_abs, tag = 'smem constant byte address 0x4 - core index']
  #allocation1 [shape = 'u32[72,128]{1,0:T(1,128)}', space=vmem, size = 0x9000, scoped, tag = 'internal scratch']
  %s0 = inlined_call_operand.vmem [shape: f32[2,4,34], index: 0, kind: input, shape index: {}]
  %s1 = inlined_call_operand.vmem [shape: f32[4,1], index: 1, kind: input, shape index: {}]
  %s2 = inlined_call_operand.vmem [shape: f32[4,1], index: 2, kind: input, shape index: {}]
  %s3 = inlined_call_operand.vmem [shape: bf16[3,8,4], index: 3, kind: input, shape index: {}]
  %s4 = inlined_call_operand.vmem [shape: f32[8,1], index: 4, kind: input, shape index: {}]
  %s5 = inlined_call_operand.hbm [shape: f32[2,8,32], index: 5, kind: output, shape index: {}]
  %s6 = sld [smem:[#allocation0]]
  $region53: #{tpu_custom_call.1} parent=0
    _
  %s8 = ssub.s32 1, %s6
  %s9 = scalar_select 0, %s8, %s6
  $region1: #{tpu_custom_call.1} parent=0
    #allocation2 [shape = 'u8[8192]{0}', space=vmem, size = 0x2000, scoped, tag = 'output window, operand 0']
    #allocation3 [shape = 's32[2]{0}', space=sflag, size = 0x8, scoped, tag = 'scoped memory for tpu_custom_call.1']
    %10 = vsyncpa [#allocation3], 0
    %s11 = scalar_lea.sflag [#allocation3], 1
    %12 = vsyncpa %s11, 0
    loop: start=0, step=1, limit=4
    $region2: #{tpu_custom_call.1} parent=1 // loop_pre_header
      _
    $region3: #{tpu_custom_call.1} parent=1 // loop_header
      %s14 = sphi 0, %s18
      %p15 = scmp.ge.s32.totalorder %s14, 4
      %s24 = sphi 0, %s26
      %s27 = sphi 0, %s24
      %s28 = sphi 0, %s27
      %s44 = sphi 0, %s28
      %s48 = sphi 0, %s48
      %s50 = sphi 0, %s48
      %s51 = sphi 0, %s50
      %s65 = sphi 0, %s51
      %s69 = sphi 0, %s69
      %s71 = sphi 0, %s69
      %s72 = sphi 0, %s71
      %s86 = sphi 0, %s72
      %s90 = sphi 0, %s90
      %s92 = sphi 0, %s90
      %s93 = sphi 0, %s92
      %s107 = sphi 0, %s93
      %s111 = sphi 0, %s111
      %s113 = sphi 0, %s111
      %s114 = sphi 0, %s113
      %s128 = sphi 0, %s114
      %s134 = sphi 0, %s136
      %s137 = sphi 0, %s134
      %s138 = sphi 0, %s137
      %s154 = sphi 0, %s138
    $region4: #{tpu_custom_call.1} parent=1 // loop_header_branch
      %17 = sbr.rel (%p15) target = $region8
    $region5: #{tpu_custom_call.1} parent=1 // loop_body
      %s19 = ssub.s32 %s14, 1
      %s20 = ssub.s32 %s14, 2
      %s21 = sadd.s32 %s14, 1
      %s22 = ssub.s32 %s14, %s21
      %p23 = scmp.eq.s32.totalorder %s22, 0
      %s25 = sadd.s32 %s24, 1
      %s26 = scalar_select %p23, %s24, %s25
      %p29 = pneg %p23
      %p30 = scmp.eq.s32.totalorder %s14, 1
      %p31 = por %p29, %p30
      %p32 = scmp.ne.s32.totalorder %s24, %s27
      %p33 = scmp.eq.s32.totalorder %s14, 0
      %p34 = por %p32, %p33
      %p35 = scmp.ne.s32.totalorder %s24, %s27
      %p36 = scmp.eq.s32.totalorder %s19, 1
      %p37 = por %p35, %p36
      %p38 = scmp.ne.s32.totalorder %s27, %s28
      %p39 = scmp.eq.s32.totalorder %s19, 0
      %p40 = por %p38, %p39
      %p41 = scmp.ne.s32.totalorder %s27, %s28
      %p42 = scmp.eq.s32.totalorder %s20, 1
      %p43 = por %p41, %p42
      %p45 = scmp.ne.s32.totalorder %s28, %s44
      %p46 = scmp.eq.s32.totalorder %s20, 0
      %p47 = por %p45, %p46
      %s49 = sadd.s32 %s48, 1
      %p52 = scmp.eq.s32.totalorder %s14, 1
      %p53 = scmp.ne.s32.totalorder %s48, %s50
      %p54 = scmp.eq.s32.totalorder %s14, 0
      %p55 = por %p53, %p54
      %p56 = scmp.ne.s32.totalorder %s48, %s50
      %p57 = scmp.eq.s32.totalorder %s19, 1
      %p58 = por %p56, %p57
      %p59 = scmp.ne.s32.totalorder %s50, %s51
      %p60 = scmp.eq.s32.totalorder %s19, 0
      %p61 = por %p59, %p60
      %p62 = scmp.ne.s32.totalorder %s50, %s51
      %p63 = scmp.eq.s32.totalorder %s20, 1
      %p64 = por %p62, %p63
      %p66 = scmp.ne.s32.totalorder %s51, %s65
      %p67 = scmp.eq.s32.totalorder %s20, 0
      %p68 = por %p66, %p67
      %s70 = sadd.s32 %s69, 1
      %p73 = scmp.eq.s32.totalorder %s14, 1
      %p74 = scmp.ne.s32.totalorder %s69, %s71
      %p75 = scmp.eq.s32.totalorder %s14, 0
      %p76 = por %p74, %p75
      %p77 = scmp.ne.s32.totalorder %s69, %s71
      %p78 = scmp.eq.s32.totalorder %s19, 1
      %p79 = por %p77, %p78
      %p80 = scmp.ne.s32.totalorder %s71, %s72
      %p81 = scmp.eq.s32.totalorder %s19, 0
      %p82 = por %p80, %p81
      %p83 = scmp.ne.s32.totalorder %s71, %s72
      %p84 = scmp.eq.s32.totalorder %s20, 1
      %p85 = por %p83, %p84
      %p87 = scmp.ne.s32.totalorder %s72, %s86
      %p88 = scmp.eq.s32.totalorder %s20, 0
      %p89 = por %p87, %p88
      %s91 = sadd.s32 %s90, 1
      %p94 = scmp.eq.s32.totalorder %s14, 1
      %p95 = scmp.ne.s32.totalorder %s90, %s92
      %p96 = scmp.eq.s32.totalorder %s14, 0
      %p97 = por %p95, %p96
      %p98 = scmp.ne.s32.totalorder %s90, %s92
      %p99 = scmp.eq.s32.totalorder %s19, 1
      %p100 = por %p98, %p99
      %p101 = scmp.ne.s32.totalorder %s92, %s93
      %p102 = scmp.eq.s32.totalorder %s19, 0
      %p103 = por %p101, %p102
      %p104 = scmp.ne.s32.totalorder %s92, %s93
      %p105 = scmp.eq.s32.totalorder %s20, 1
      %p106 = por %p104, %p105
      %p108 = scmp.ne.s32.totalorder %s93, %s107
      %p109 = scmp.eq.s32.totalorder %s20, 0
      %p110 = por %p108, %p109
      %s112 = sadd.s32 %s111, 1
      %p115 = scmp.eq.s32.totalorder %s14, 1
      %p116 = scmp.ne.s32.totalorder %s111, %s113
      %p117 = scmp.eq.s32.totalorder %s14, 0
      %p118 = por %p116, %p117
      %p119 = scmp.ne.s32.totalorder %s111, %s113
      %p120 = scmp.eq.s32.totalorder %s19, 1
      %p121 = por %p119, %p120
      %p122 = scmp.ne.s32.totalorder %s113, %s114
      %p123 = scmp.eq.s32.totalorder %s19, 0
      %p124 = por %p122, %p123
      %p125 = scmp.ne.s32.totalorder %s113, %s114
      %p126 = scmp.eq.s32.totalorder %s20, 1
      %p127 = por %p125, %p126
      %p129 = scmp.ne.s32.totalorder %s114, %s128
      %p130 = scmp.eq.s32.totalorder %s20, 0
      %p131 = por %p129, %p130
      %s132 = ssub.s32 %s14, %s21
      %p133 = scmp.eq.s32.totalorder %s132, 0
      %s135 = sadd.s32 %s134, 1
      %s136 = scalar_select %p133, %s134, %s135
      %p139 = pneg %p133
      %p140 = scmp.eq.s32.totalorder %s14, 1
      %p141 = por %p139, %p140
      %p142 = scmp.ne.s32.totalorder %s134, %s137
      %p143 = scmp.eq.s32.totalorder %s14, 0
      %p144 = por %p142, %p143
      %p145 = scmp.ne.s32.totalorder %s134, %s137
      %p146 = scmp.eq.s32.totalorder %s19, 1
      %p147 = por %p145, %p146
      %p148 = scmp.ne.s32.totalorder %s137, %s138
      %p149 = scmp.eq.s32.totalorder %s19, 0
      %p150 = por %p148, %p149
      %p151 = scmp.ne.s32.totalorder %s137, %s138
      %p152 = scmp.eq.s32.totalorder %s20, 1
      %p153 = por %p151, %p152
      %p155 = scmp.ne.s32.totalorder %s138, %s154
      %p156 = scmp.eq.s32.totalorder %s20, 0
      %p157 = por %p155, %p156
      %p158 = scmp.le.s32.totalorder 1, %s14
      %p159 = scmp.lt.s32.totalorder %s14, 3
      %p160 = pnand %p158, %p159
      %p161 = pneg %p160
      // Predicated region
      $region9: #{tpu_custom_call.1} parent=5 // pred_check
        _
      $region10: #{tpu_custom_call.1} parent=5 // pred_check_branch
        %163 = sbr.rel (%p160) target = $region12
      $region11: #{tpu_custom_call.1} parent=5 // pred_region
        %s164 = ssub.s32 %s14, 1
        // Predicated region
        $region13: #{tpu_custom_call.1} parent=11 // pred_check
          %p165 = pneg %p61
        $region14: #{tpu_custom_call.1} parent=11 // pred_check_branch
          %167 = sbr.rel (%p165) target = $region16
        $region15: #{tpu_custom_call.1} parent=11 // pred_region
          _
        $region16: #{tpu_custom_call.1} parent=11 // pred_fallthru
          _
        // Predicated region
        $region17: #{tpu_custom_call.1} parent=11 // pred_check
          %p168 = pneg %p82
        $region18: #{tpu_custom_call.1} parent=11 // pred_check_branch
          %170 = sbr.rel (%p168) target = $region20
        $region19: #{tpu_custom_call.1} parent=11 // pred_region
          _
        $region20: #{tpu_custom_call.1} parent=11 // pred_fallthru
          _
        // Predicated region
        $region21: #{tpu_custom_call.1} parent=11 // pred_check
          %p171 = pneg %p103
        $region22: #{tpu_custom_call.1} parent=11 // pred_check_branch
          %173 = sbr.rel (%p171) target = $region24
        $region23: #{tpu_custom_call.1} parent=11 // pred_region
          _
        $region24: #{tpu_custom_call.1} parent=11 // pred_fallthru
          _
        // Predicated region
        $region25: #{tpu_custom_call.1} parent=11 // pred_check
          %p174 = pneg %p124
        $region26: #{tpu_custom_call.1} parent=11 // pred_check_branch
          %176 = sbr.rel (%p174) target = $region28
        $region27: #{tpu_custom_call.1} parent=11 // pred_region
          _
        $region28: #{tpu_custom_call.1} parent=11 // pred_fallthru
          _
      $region12: #{tpu_custom_call.1} parent=5 // pred_fallthru
        _
      %p177 = scmp.lt.s32.totalorder %s14, 2
      // Predicated region
      $region29: #{tpu_custom_call.1} parent=5 // pred_check
        %p178 = pneg %p177
      $region30: #{tpu_custom_call.1} parent=5 // pred_check_branch
        %180 = sbr.rel (%p178) target = $region32
      $region31: #{tpu_custom_call.1} parent=5 // pred_region
        // Predicated region
        $region33: #{tpu_custom_call.1} parent=31 // pred_check
          %p181 = pneg %p34
        $region34: #{tpu_custom_call.1} parent=31 // pred_check_branch
          %183 = sbr.rel (%p181) target = $region36
        $region35: #{tpu_custom_call.1} parent=31 // pred_region
          %p184 = scmp.lt.s32.totalorder %s14, 1
          %s185 = scalar_select %p184, %s14, 1
          %s186 = smul.addr %s185, 4
          %s187 = scalar_lea.vmem %s0, %s186
        $region36: #{tpu_custom_call.1} parent=31 // pred_fallthru
          _
      $region32: #{tpu_custom_call.1} parent=5 // pred_fallthru
        _
      %p188 = scmp.le.s32.totalorder 1, %s14
      %p189 = scmp.lt.s32.totalorder %s14, 3
      %p190 = pnand %p188, %p189
      %p191 = pneg %p190
      // Predicated region
      $region37: #{tpu_custom_call.1} parent=5 // pred_check
        _
      $region38: #{tpu_custom_call.1} parent=5 // pred_check_branch
        %193 = sbr.rel (%p190) target = $region40
      $region39: #{tpu_custom_call.1} parent=5 // pred_region
        %s194 = ssub.s32 %s14, 1
        %p195 = scmp.lt.s32.totalorder %s19, 1
        %s196 = scalar_select %p195, %s19, 1
        %s197 = smul.addr %s196, 4
        %s198 = scalar_lea.vmem %s0, %s197
        %p199 = pneg %p40
        %p200 = pneg %p37
        %p201 = pneg %p61
        %p202 = pneg %p58
        %p203 = pneg %p82
        %p204 = pneg %p79
        %p205 = pneg %p103
        %p206 = pneg %p100
        %p207 = pneg %p124
        %p208 = pneg %p121
        %p209 = pneg %p150
        %p210 = pneg %p147
        %s211 = sand.u32 %s137, 1
        %s212 = scalar_lea.sflag [#allocation3], %s211
        %s213 = sand.u32 %s137, 1
        %s214 = smul.addr %s213, 8
        %s215 = scalar_lea.vmem [#allocation2], %s214
        %p216 = scmp.lt.s32.totalorder %s19, 1
        %s217 = scalar_select %p216, %s19, 1
        %s218 = smul.addr %s217, 4
        %s219 = scalar_lea.vmem %s0, %s218
        %v221 = vld [vmem:[%s219] sm:$0xf]
        %223 = vrot.lane.b32.xlu0 %v221, 127
        %v224 = vpop.permute.xlu0 %223
        %vm226 = vcmask 257024
        %v227 = vsel %vm226, %v224, 0.0
        %228 = vadd.xlane.f32.xlu0 %v227
        %v229 = vpop.xlane.xlu0 %228
        %v230 = vlaneseq
        %v231 = vshrl.u32 %v230, 7
        %vm232 = vcmp.ge.s32.totalorder %v231, 0
        %vm233 = vcmp.lt.s32.totalorder %v231, 1
        %vm234 = vmand %vm232, %vm233
        %v235 = vsel %vm234, %v229, 0.0
        %vm236 = vcmask 3072
        %v237 = vsel %vm236, %v235, 0.0
        %238 = vadd.xlane.f32.xlu0 %v237
        %v239 = vpop.xlane.xlu0 %238
        %v240 = vrot.slane %v239, 4
        %v241 = vadd.f32 %v239, %v240
        %v242 = vrot.slane %v241, 2
        %v243 = vadd.f32 %v241, %v242
        %v244 = vrot.slane %v243, 1
        %v245 = vadd.f32 %v243, %v244
        %s246 = vtos %v245
        %v247 = vstv %s246
        %v248 = vmul.f32 %v247, 0.03125
        %v249 = vsel %vm234, %v248, 0.0
        %v250 = vadd.f32 %v249, 0.0
        %vm251 = vcmp.ge.s32.totalorder %v231, 1
        %vm252 = vcmp.lt.s32.totalorder %v231, 2
        %vm253 = vmand %vm251, %vm252
        %v254 = vsel %vm253, %v229, 0.0
        %v255 = vsel %vm236, %v254, 0.0
        %256 = vadd.xlane.f32.xlu0 %v255
        %v257 = vpop.xlane.xlu0 %256
        %v258 = vrot.slane %v257, 4
        %v259 = vadd.f32 %v257, %v258
        %v260 = vrot.slane %v259, 2
        %v261 = vadd.f32 %v259, %v260
        %v262 = vrot.slane %v261, 1
        %v263 = vadd.f32 %v261, %v262
        %s264 = vtos %v263
        %v265 = vstv %s264
        %v266 = vmul.f32 %v265, 0.03125
        %v267 = vsel %vm253, %v266, 0.0
        %v268 = vadd.f32 %v250, %v267
        %vm269 = vcmp.ge.s32.totalorder %v231, 2
        %vm270 = vcmp.lt.s32.totalorder %v231, 3
        %vm271 = vmand %vm269, %vm270
        %v272 = vsel %vm271, %v229, 0.0
        %v273 = vsel %vm236, %v272, 0.0
        %274 = vadd.xlane.f32.xlu0 %v273
        %v275 = vpop.xlane.xlu0 %274
        %v276 = vrot.slane %v275, 4
        %v277 = vadd.f32 %v275, %v276
        %v278 = vrot.slane %v277, 2
        %v279 = vadd.f32 %v277, %v278
        %v280 = vrot.slane %v279, 1
        %v281 = vadd.f32 %v279, %v280
        %s282 = vtos %v281
        %v283 = vstv %s282
        %v284 = vmul.f32 %v283, 0.03125
        %v285 = vsel %vm271, %v284, 0.0
        %v286 = vadd.f32 %v268, %v285
        %vm287 = vcmp.ge.s32.totalorder %v231, 3
        %vm288 = vcmp.lt.s32.totalorder %v231, 4
        %vm289 = vmand %vm287, %vm288
        %v290 = vsel %vm289, %v229, 0.0
        %v291 = vsel %vm236, %v290, 0.0
        %292 = vadd.xlane.f32.xlu0 %v291
        %v293 = vpop.xlane.xlu0 %292
        %v294 = vrot.slane %v293, 4
        %v295 = vadd.f32 %v293, %v294
        %v296 = vrot.slane %v295, 2
        %v297 = vadd.f32 %v295, %v296
        %v298 = vrot.slane %v297, 1
        %v299 = vadd.f32 %v297, %v298
        %s300 = vtos %v299
        %v301 = vstv %s300
        %v302 = vmul.f32 %v301, 0.03125
        %v303 = vsel %vm289, %v302, 0.0
        %v304 = vadd.f32 %v286, %v303
        %v305 = vsub.f32 %v221, %v304
        %v306 = vmul.f32 %v305, %v305
        %308 = vrot.lane.b32.xlu0 %v306, 127
        %v309 = vpop.permute.xlu0 %308
        %v311 = vsel %vm226, %v309, 0.0
        %312 = vadd.xlane.f32.xlu0 %v311
        %v313 = vpop.xlane.xlu0 %312
        %v314 = vsel %vm234, %v313, 0.0
        %v315 = vsel %vm236, %v314, 0.0
        %316 = vadd.xlane.f32.xlu0 %v315
        %v317 = vpop.xlane.xlu0 %316
        %v318 = vrot.slane %v317, 4
        %v319 = vadd.f32 %v317, %v318
        %v320 = vrot.slane %v319, 2
        %v321 = vadd.f32 %v319, %v320
        %v322 = vrot.slane %v321, 1
        %v323 = vadd.f32 %v321, %v322
        %s324 = vtos %v323
        %v325 = vstv %s324
        %v326 = vmul.f32 %v325, 0.03125
        %v327 = vsel %vm234, %v326, 0.0
        %v328 = vadd.f32 %v327, 0.0
        %v329 = vsel %vm253, %v313, 0.0
        %v330 = vsel %vm236, %v329, 0.0
        %331 = vadd.xlane.f32.xlu0 %v330
        %v332 = vpop.xlane.xlu0 %331
        %v333 = vrot.slane %v332, 4
        %v334 = vadd.f32 %v332, %v333
        %v335 = vrot.slane %v334, 2
        %v336 = vadd.f32 %v334, %v335
        %v337 = vrot.slane %v336, 1
        %v338 = vadd.f32 %v336, %v337
        %s339 = vtos %v338
        %v340 = vstv %s339
        %v341 = vmul.f32 %v340, 0.03125
        %v342 = vsel %vm253, %v341, 0.0
        %v343 = vadd.f32 %v328, %v342
        %v344 = vsel %vm271, %v313, 0.0
        %v345 = vsel %vm236, %v344, 0.0
        %346 = vadd.xlane.f32.xlu0 %v345
        %v347 = vpop.xlane.xlu0 %346
        %v348 = vrot.slane %v347, 4
        %v349 = vadd.f32 %v347, %v348
        %v350 = vrot.slane %v349, 2
        %v351 = vadd.f32 %v349, %v350
        %v352 = vrot.slane %v351, 1
        %v353 = vadd.f32 %v351, %v352
        %s354 = vtos %v353
        %v355 = vstv %s354
        %v356 = vmul.f32 %v355, 0.03125
        %v357 = vsel %vm271, %v356, 0.0
        %v358 = vadd.f32 %v343, %v357
        %v359 = vsel %vm289, %v313, 0.0
        %v360 = vsel %vm236, %v359, 0.0
        %361 = vadd.xlane.f32.xlu0 %v360
        %v362 = vpop.xlane.xlu0 %361
        %v363 = vrot.slane %v362, 4
        %v364 = vadd.f32 %v362, %v363
        %v365 = vrot.slane %v364, 2
        %v366 = vadd.f32 %v364, %v365
        %v367 = vrot.slane %v366, 1
        %v368 = vadd.f32 %v366, %v367
        %s369 = vtos %v368
        %v370 = vstv %s369
        %v371 = vmul.f32 %v370, 0.03125
        %v372 = vsel %vm289, %v371, 0.0
        %v373 = vadd.f32 %v358, %v372
        %v374 = vadd.f32 %v373, 1e-05
        %v375 = vrsqrt.pop %v374
        %v376 = vmul.f32 %v375, %v374
        %v377 = vmul.f32 %v376, %v375
        %v378 = vmul.f32 0.5, %v377
        %v379 = vsub.f32 1.5, %v378
        %v380 = vmul.f32 %v375, %v379
        %vm381 = vweird.f32 %v374
        %vm382 = vweird.f32 %v375
        %vm383 = vmor %vm381, %vm382
        %v384 = vsel %vm383, %v375, %v380
        %v385 = vmul.f32 %v305, %v384
        %v386 = vld [vmem:[%s1] sm:$0xf]
        %388 = vset.pattern.permute.xlu0 0
        %389 = vperm.xlu0 %388, %v386
        %v390 = vpop.permute.xlu0 %389
        %v392 = vmul.f32 %v385, %v390
        %v393 = vld [vmem:[%s2] sm:$0xf]
        %395 = vset.pattern.permute.xlu0 0
        %396 = vperm.xlu0 %395, %v393
        %v397 = vpop.permute.xlu0 %396
        %v399 = vadd.f32 %v392, %v397
        %v400 = vmax.f32 %v399, 0.0
        %v401 = vlaneseq
        %v402 = vand.u32 %v401, 127
        %vm403 = vcmp.ge.s32.totalorder %v402, 1
        %vm404 = vcmp.lt.s32.totalorder %v402, 33
        %vm405 = vmand %vm403, %vm404
        %v406 = vsel %vm405, %v400, 0.0
        %v407 = vpack.c.bf16 %v406, %v406
        %v408 = vld [vmem:[%s4] sm:$0xff]
        %v409 = vld [vmem:[%s3] sm:$0xf]
        %vm410 = vcmask 31744
        %v412 = vsel %vm410, %v409, 0
        %vm414 = vcmask 1041408
        %v416 = vsel %vm414, %v407, 0
        %418 = vmatpush.bf16.msra.mxu0 0
        %419 = vmatpush.bf16.msra.mxu0 0
        %420 = vmatpush.bf16.msra.mxu0 0
        %421 = vmatpush.bf16.msra.mxu0 0
        %422 = vmatpush.bf16.msra.mxu0 0
        %423 = vmatpush.bf16.msra.mxu0 0
        %424 = vmatpush.bf16.msra.mxu0 0
        %425 = vmatpush.bf16.msra.mxu0 %v416
        %426 = vmatmul.bf16.gmra.mxu0 %v412
        %v427 = vpop.f32.mrf.mxu0
        %v428 = vadd.f32 0.0, %v427
        %v429 = vpop.f32.mrf.mxu0
        %430 = vdwg.mxu0
        %432 = vset.pattern.permute.xlu0 0
        %433 = vperm.xlu0 %432, %v408
        %v434 = vpop.permute.xlu0 %433
        %v436 = vadd.f32 %v434, %v428
        %s437 = scalar_lea.vmem %s3, 4
        %v438 = vld [vmem:[%s437] sm:$0xf]
        %v440 = vunpack.c.l.b16 %v407
        %v441 = vpack.c.b16 %v440, %v440
        %442 = vrot.lane.b32.xlu0 %v441, 127
        %v443 = vpop.permute.xlu0 %442
        %v445 = vsel %vm410, %v438, 0
        %v448 = vsel %vm414, %v443, 0
        %450 = vmatpush.bf16.msra.mxu0 0
        %451 = vmatpush.bf16.msra.mxu0 0
        %452 = vmatpush.bf16.msra.mxu0 0
        %453 = vmatpush.bf16.msra.mxu0 0
        %454 = vmatpush.bf16.msra.mxu0 0
        %455 = vmatpush.bf16.msra.mxu0 0
        %456 = vmatpush.bf16.msra.mxu0 0
        %457 = vmatpush.bf16.msra.mxu0 %v448
        %458 = vmatmul.bf16.gmra.mxu0 %v445
        %v459 = vpop.f32.mrf.mxu0
        %v460 = vadd.f32 0.0, %v459
        %v461 = vpop.f32.mrf.mxu0
        %462 = vdwg.mxu0
        %v463 = vadd.f32 %v436, %v460
        %s464 = scalar_lea.vmem %s3, 8
        %v465 = vld [vmem:[%s464] sm:$0xf]
        %466 = vrot.lane.b32.xlu0 %v441, 126
        %v467 = vpop.permute.xlu0 %466
        %v469 = vsel %vm410, %v465, 0
        %v472 = vsel %vm414, %v467, 0
        %474 = vmatpush.bf16.msra.mxu0 0
        %475 = vmatpush.bf16.msra.mxu0 0
        %476 = vmatpush.bf16.msra.mxu0 0
        %477 = vmatpush.bf16.msra.mxu0 0
        %478 = vmatpush.bf16.msra.mxu0 0
        %479 = vmatpush.bf16.msra.mxu0 0
        %480 = vmatpush.bf16.msra.mxu0 0
        %481 = vmatpush.bf16.msra.mxu0 %v472
        %482 = vmatmul.bf16.gmra.mxu0 %v469
        %v483 = vpop.f32.mrf.mxu0
        %v484 = vadd.f32 0.0, %v483
        %v485 = vpop.f32.mrf.mxu0
        %486 = vdwg.mxu0
        %v487 = vadd.f32 %v463, %v484
        %vm488 = vcmask 261120
        %489 = vst.msk [vmem:[%s215] sm:$0xff] %vm488, %v487
        %s490 = sand.u32 %s137, 1
        %s491 = scalar_lea.sflag [#allocation3], %s490
        %s492 = sand.u32 %s137, 1
        %s493 = smul.addr %s492, 8
        %s494 = scalar_lea.vmem [#allocation2], %s493
        // Predicated region
        $region41: #{tpu_custom_call.1} parent=39 // pred_check
          %p495 = pneg %p147
        $region42: #{tpu_custom_call.1} parent=39 // pred_check_branch
          %497 = sbr.rel (%p495) target = $region44
        $region43: #{tpu_custom_call.1} parent=39 // pred_region
          %499 = vsyncadd %s491, 0
          %s500 = smul.addr %s19, 8
          %s501 = scalar_lea.hbm %s5, %s500
          %s503 = sshll.u32 %s494, 4
          %s504 = int_to_ptr.vmem [resolvable:$true] %s503
          %s505 = sshll.u32 %s501, 4
          %s506 = int_to_ptr.hbm [resolvable:$true] %s505
          %508 = dma.vmem_to_hbm [thread:$0]  %s504, 128, %s506, %s491
        $region44: #{tpu_custom_call.1} parent=39 // pred_fallthru
          _
      $region40: #{tpu_custom_call.1} parent=5 // pred_fallthru
        _
      %p509 = scmp.le.s32.totalorder 2, %s14
      // Predicated region
      $region45: #{tpu_custom_call.1} parent=5 // pred_check
        %p510 = pneg %p509
      $region46: #{tpu_custom_call.1} parent=5 // pred_check_branch
        %512 = sbr.rel (%p510) target = $region48
      $region47: #{tpu_custom_call.1} parent=5 // pred_region
        %s513 = ssub.s32 %s14, 2
        // Predicated region
        $region49: #{tpu_custom_call.1} parent=47 // pred_check
          %p514 = pneg %p153
        $region50: #{tpu_custom_call.1} parent=47 // pred_check_branch
          %516 = sbr.rel (%p514) target = $region52
        $region51: #{tpu_custom_call.1} parent=47 // pred_region
          %s517 = sand.u32 %s138, 1
          %s518 = scalar_lea.sflag [#allocation3], %s517
          %s519 = sand.u32 %s138, 1
          %s520 = smul.addr %s519, 8
          %s521 = scalar_lea.vmem [#allocation2], %s520
          %523 = dma.done %s518, 128
        $region52: #{tpu_custom_call.1} parent=47 // pred_fallthru
          _
      $region48: #{tpu_custom_call.1} parent=5 // pred_fallthru
        _
    $region6: #{tpu_custom_call.1} parent=1 // loop_footer
      %s18 = sadd.s32 1, %s14
    $region7: #{tpu_custom_call.1} parent=1 // loop_footer_branch
      %13 = sbr.rel target = $region3
    $region8: #{tpu_custom_call.1} parent=1 // loop_exit
      _
    %524 = vsyncpa [#allocation3], 1
    %s525 = scalar_lea.sflag [#allocation3], 1
    %526 = vsyncpa %s525, 1

</llo_original>
